<compile_context>
chip_gen: v5e
topology: v5e:2x2
jax: 0.10.0
libtpu: 0.0.40
codegen_flags: <defaults>
</compile_context>

<pallas_src>
import functools
import math

import jax
import jax.numpy as jnp
from jax.experimental import pallas as pl
from jax.experimental.pallas import tpu as pltpu

_PI = math.pi
_LANES = 128
_SUBLANES = 8
_TARGET_BLOCKS = 8          # >= 2 blocks per TensorCore on v7x, pipelining on v5e/v6e
_MAX_TILE_ROWS = 1024       # ~3 MiB double-buffered VMEM at f32 — far under limits
_MIN_PALLAS_BATCH = 32768   # below this the jnp fast path beats relayout + launch


def _round_up(v, m):
    return ((v + m - 1) // m) * m


# ----------------------------------------------------------------------------
# Glue: fixed StronglyEntanglingLayers unitary from weights (6, 2, 3)
# ----------------------------------------------------------------------------
def _rz(a):
    return jnp.array(
        [[jnp.exp(-0.5j * a), 0.0], [0.0, jnp.exp(0.5j * a)]], dtype=jnp.complex64
    )


def _ry(t):
    c, s = jnp.cos(t / 2), jnp.sin(t / 2)
    return jnp.array([[c, -s], [s, c]], dtype=jnp.complex64)


def _rot(phi, theta, omega):
    # qml.Rot(phi, theta, omega) = RZ(omega) @ RY(theta) @ RZ(phi)
    return _rz(omega) @ _ry(theta) @ _rz(phi)


# CNOT(control=0, target=1) and CNOT(control=1, target=0); wire 0 = MSB.
_CNOT01 = jnp.array(
    [[1, 0, 0, 0], [0, 1, 0, 0], [0, 0, 0, 1], [0, 0, 1, 0]], dtype=jnp.complex64
)
_CNOT10 = jnp.array(
    [[1, 0, 0, 0], [0, 0, 0, 1], [0, 0, 1, 0], [0, 1, 0, 0]], dtype=jnp.complex64
)


def build_entangling_unitary(weights):
    """weights: (n_layers, 2, 3).  For 2 wires the entangling range is always 1."""
    u = jnp.eye(4, dtype=jnp.complex64)
    for l in range(weights.shape[0]):
        r0 = _rot(weights[l, 0, 0], weights[l, 0, 1], weights[l, 0, 2])
        r1 = _rot(weights[l, 1, 0], weights[l, 1, 1], weights[l, 1, 2])
        layer_u = _CNOT10 @ _CNOT01 @ jnp.kron(r0, r1)
        u = layer_u @ u
    return u


# ----------------------------------------------------------------------------
# Glue: fold U, Pauli-Z readout and Linear(2,1) into a 3x3 bilinear form K
#       y = (1, cos(pi*x0), sin(pi*x0)) @ K @ (1, cos(pi*x1), sin(pi*x1))^T
# ----------------------------------------------------------------------------
def _fold_params(unitary, clf_w, clf_b):
    ur = jnp.real(unitary).astype(jnp.float32)
    ui = jnp.imag(unitary).astype(jnp.float32)
    # psi = [p0, -i*p1, -i*p2, -p3] with p = (ca*cb, ca*sb, sa*cb, sa*sb)
    m = jnp.stack([ur[:, 0], ui[:, 1], ui[:, 2], -ur[:, 3]], axis=1)   # Re(U psi) = m @ p
    n = jnp.stack([ui[:, 0], -ur[:, 1], -ur[:, 2], -ui[:, 3]], axis=1)  # Im(U psi) = n @ p
    z_signs = jnp.array(
        [[1.0, 1.0], [1.0, -1.0], [-1.0, 1.0], [-1.0, -1.0]], jnp.float32
    )
    c = z_signs @ clf_w.astype(jnp.float32)[0]                          # (4,)
    # y = bias + p^T q p
    q = m.T @ (c[:, None] * m) + n.T @ (c[:, None] * n)
    # p_{2i+j} = u_i v_j with u=(ca,sa), v=(cb,sb);  uu^T = 0.5*(E0 + cA*E1 + sA*E2)
    # (double-angle: cA = cos(pi*x0) etc.), same for vv^T.  Contract q against
    # those bases -> 3x3 bilinear coefficients.
    q4 = q.reshape(2, 2, 2, 2)                                          # q4[i,j,k,l]
    e = jnp.stack(
        [
            jnp.eye(2, dtype=jnp.float32),                              # constant
            jnp.array([[1.0, 0.0], [0.0, -1.0]], jnp.float32),          # cos term
            jnp.array([[0.0, 1.0], [1.0, 0.0]], jnp.float32),           # sin term
        ]
    )
    k = 0.25 * jnp.einsum("ijkl,rik,sjl->rs", q4, e, e)                 # (3, 3)
    k = k.at[0, 0].add(clf_b.astype(jnp.float32)[0])                    # absorb bias
    return k.reshape(-1)                                                # 9 coefficients


# ----------------------------------------------------------------------------
# Pallas kernel: 4 transcendentals + folded 3x3 bilinear form per element
# ----------------------------------------------------------------------------
def hybrid_xor_kernel(x_ref, k_ref, out_ref):
    # x_ref: (2, T, 128) f32 — feature-major, batch dense over sublanes+lanes
    # k_ref: (9,) f32 in SMEM — flattened bilinear coefficients (bias in k00)
    # Hoist all SMEM scalar reads before any vector work.
    k00 = k_ref[0]
    k01 = k_ref[1]
    k02 = k_ref[2]
    k10 = k_ref[3]
    k11 = k_ref[4]
    k12 = k_ref[5]
    k20 = k_ref[6]
    k21 = k_ref[7]
    k22 = k_ref[8]

    a = x_ref[0] * _PI                      # (T, 128) full angle, wire 0
    b = x_ref[1] * _PI                      # (T, 128) full angle, wire 1
    ca = jnp.cos(a)
    sa = jnp.sin(a)
    cb = jnp.cos(b)
    sb = jnp.sin(b)

    # Three short independent chains, then a 2-FMA combine (tree, not serial).
    r0 = (k00 + k01 * cb) + k02 * sb
    r1 = (k10 + k11 * cb) + k12 * sb
    r2 = (k20 + k21 * cb) + k22 * sb
    out_ref[...] = r0 + (ca * r1 + sa * r2)


# ----------------------------------------------------------------------------
# Wrappers
# ----------------------------------------------------------------------------
def _choose_tiling(rows):
    """Tile rows so that tile % 8 == 0, padding <= one tile, and (when the batch
    allows it) there are >= _TARGET_BLOCKS grid steps for DMA/compute overlap
    and megacore sharding."""
    tile_rows = _round_up(pl.cdiv(rows, _TARGET_BLOCKS), _SUBLANES)
    tile_rows = max(_SUBLANES, min(_MAX_TILE_ROWS, tile_rows))
    rows_p = _round_up(rows, tile_rows)
    return tile_rows, rows_p, rows_p // tile_rows


def _run_pallas(x_planar, coef, tile_rows):
    """x_planar: (2, rows_p, 128) f32 with rows_p % tile_rows == 0."""
    rows_p = x_planar.shape[1]
    n_blocks = rows_p // tile_rows
    return pl.pallas_call(
        hybrid_xor_kernel,
        out_shape=jax.ShapeDtypeStruct((rows_p, _LANES), jnp.float32),
        grid=(n_blocks,),
        in_specs=[
            pl.BlockSpec((2, tile_rows, _LANES), lambda i: (0, i, 0)),
            pl.BlockSpec(memory_space=pltpu.MemorySpace.SMEM),   # 9 coefficients
        ],
        out_specs=pl.BlockSpec((tile_rows, _LANES), lambda i: (i, 0)),
        compiler_params=pltpu.CompilerParams(
            dimension_semantics=("parallel",),   # shard batch blocks across TCs
        ),
    )(x_planar, coef)


def _bilinear_jnp(x, coef):
    """Same folded math in plain jnp (small-batch fast path)."""
    k = coef.reshape(3, 3)
    a = x[:, 0] * _PI
    b = x[:, 1] * _PI
    fa = jnp.stack([jnp.ones_like(a), jnp.cos(a), jnp.sin(a)], axis=-1)
    fb = jnp.stack([jnp.ones_like(b), jnp.cos(b), jnp.sin(b)], axis=-1)
    return jnp.einsum("bi,ij,bj->b", fa, k, fb)[:, None]


def hybrid_xor_forward_planar(x_planar, unitary, clf_w, clf_b, n_valid=None):
    """Zero-relayout entry point: x_planar is (2, R, 128) float32 with sample s,
    feature f stored at x_planar[f, s // 128, s % 128].  Skips the HBM
    transpose/pad pass entirely (use this when the producer can emit
    feature-major data)."""
    coef = _fold_params(unitary, clf_w, clf_b)
    rows = x_planar.shape[1]
    n = rows * _LANES if n_valid is None else n_valid
    tile_rows, rows_p, _ = _choose_tiling(rows)
    xp = x_planar.astype(jnp.float32)
    if rows_p != rows:
        xp = jnp.pad(xp, ((0, 0), (0, rows_p - rows), (0, 0)))
    out = _run_pallas(xp, coef, tile_rows)
    return out.reshape(-1)[:n].reshape(n, 1)


def hybrid_xor_forward(x, unitary, clf_w, clf_b, *, min_pallas_batch=_MIN_PALLAS_BATCH):
    """x: (B, 2) in [0, 1].  Returns (B, 1), matching HybridXOR.forward."""
    b = x.shape[0]
    coef = _fold_params(unitary, clf_w, clf_b)

    if b < min_pallas_batch:
        # Small-batch fast path: relayout + launch overhead dwarfs the math.
        return _bilinear_jnp(x.astype(jnp.float32), coef)

    rows = pl.cdiv(b, _LANES)
    tile_rows, rows_p, _ = _choose_tiling(rows)
    total = rows_p * _LANES

    # TODO(synk): this transpose/pad is one extra HBM read+write of the input;
    # producers that can hand over feature-major (2, R, 128) data should call
    # hybrid_xor_forward_planar() and skip it entirely.
    xt = jnp.transpose(x.astype(jnp.float32))          # (2, B)
    xt = jnp.pad(xt, ((0, 0), (0, total - b)))
    xt = xt.reshape(2, rows_p, _LANES)

    out = _run_pallas(xt, coef, tile_rows)
    return out.reshape(-1)[:b].reshape(b, 1)


# ----------------------------------------------------------------------------
# Pure-JAX reference (unfused complex math) for correctness checks
# ----------------------------------------------------------------------------
def hybrid_xor_reference(x, unitary, clf_w, clf_b):
    half = x * (math.pi * 0.5)
    ca, sa = jnp.cos(half[:, 0]), jnp.sin(half[:, 0])
    cb, sb = jnp.cos(half[:, 1]), jnp.sin(half[:, 1])
    psi = jnp.stack(
        [
            (ca * cb).astype(jnp.complex64),
            -1j * (ca * sb).astype(jnp.complex64),
            -1j * (sa * cb).astype(jnp.complex64),
            -(sa * sb).astype(jnp.complex64),
        ],
        axis=-1,
    )
    psi = psi @ unitary.T
    probs = jnp.abs(psi) ** 2
    z_signs = jnp.array(
        [[1.0, 1.0], [1.0, -1.0], [-1.0, 1.0], [-1.0, -1.0]], dtype=jnp.float32
    )
    z = probs.astype(jnp.float32) @ z_signs            # (B, 2) = [<Z0>, <Z1>]
    return z @ clf_w.T + clf_b[None, :]


# ----------------------------------------------------------------------------
if __name__ == "__main__":
    key = jax.random.PRNGKey(0)
    k_w, k_lw, k_lb, k_x1, k_x2 = jax.random.split(key, 5)

    n_qubits = 2
    # quantum weights ~ U(0, 2*pi), shape (6, n_qubits, 3)
    q_weights = jax.random.uniform(
        k_w, (6, n_qubits, 3), jnp.float32, 0.0, 2.0 * math.pi
    )
    # nn.Linear(2, 1) default init: U(-1/sqrt(2), 1/sqrt(2))
    bound = 1.0 / math.sqrt(2.0)
    clf_w = jax.random.uniform(k_lw, (1, 2), jnp.float32, -bound, bound)
    clf_b = jax.random.uniform(k_lb, (1,), jnp.float32, -bound, bound)

    unitary = build_entangling_unitary(q_weights)

    # XOR-sized batch: takes the jnp fast path (no relayout / kernel launch).
    x_small = jax.random.uniform(k_x1, (8, 2), dtype=jnp.float32)
    out_small = jax.block_until_ready(
        hybrid_xor_forward(x_small, unitary, clf_w, clf_b)
    )
    ref_small = hybrid_xor_reference(x_small, unitary, clf_w, clf_b)
    assert out_small.shape == (8, 1)
    assert jnp.allclose(out_small, ref_small, atol=5e-5, rtol=1e-4), (
        out_small, ref_small)

    # Modest batch forced through the Pallas kernel path:
    # 4000 samples -> 32 rows -> 4 lane-dense grid blocks + tail padding.
    x_big = jax.random.uniform(k_x2, (4000, 2), dtype=jnp.float32)
    fwd = jax.jit(functools.partial(hybrid_xor_forward, min_pallas_batch=0))
    out_big = jax.block_until_ready(fwd(x_big, unitary, clf_w, clf_b))
    ref_big = hybrid_xor_reference(x_big, unitary, clf_w, clf_b)
    assert out_big.shape == (4000, 1)
    assert jnp.allclose(out_big, ref_big, atol=5e-5, rtol=1e-4)

    print("KERNEL_OK")
</pallas_src>

<mosaic_0001>
module attributes {stable_mosaic.version = 11 : i64} {
  func.func @hybrid_xor_kernel(%arg0: i32, %arg1: memref<2x8x128xf32, #tpu.memory_space<vmem>>, %arg2: memref<9xf32, #tpu.memory_space<smem>>, %arg3: memref<8x128xf32, #tpu.memory_space<vmem>>) attributes {dimension_semantics = [#tpu.dimension_semantics<parallel>], iteration_bounds = array<i64: 4>, scalar_prefetch = 0 : i64, scratch_operands = 0 : i64, tpu.core_type = #tpu.core_type<tc>, window_params = [{transform_indices = @transform_0, window_bounds = array<i64: 2, 8, 128>}, {transform_indices = @transform_1, window_bounds = array<i64: 9>}, {transform_indices = @transform_2, window_bounds = array<i64: 8, 128>}]} {
    %c0 = arith.constant 0 : index
    %0 = memref.load %arg2[%c0] : memref<9xf32, #tpu.memory_space<smem>>
    %c1 = arith.constant 1 : index
    %1 = memref.load %arg2[%c1] : memref<9xf32, #tpu.memory_space<smem>>
    %c2 = arith.constant 2 : index
    %2 = memref.load %arg2[%c2] : memref<9xf32, #tpu.memory_space<smem>>
    %c3 = arith.constant 3 : index
    %3 = memref.load %arg2[%c3] : memref<9xf32, #tpu.memory_space<smem>>
    %c4 = arith.constant 4 : index
    %4 = memref.load %arg2[%c4] : memref<9xf32, #tpu.memory_space<smem>>
    %c5 = arith.constant 5 : index
    %5 = memref.load %arg2[%c5] : memref<9xf32, #tpu.memory_space<smem>>
    %c6 = arith.constant 6 : index
    %6 = memref.load %arg2[%c6] : memref<9xf32, #tpu.memory_space<smem>>
    %c7 = arith.constant 7 : index
    %7 = memref.load %arg2[%c7] : memref<9xf32, #tpu.memory_space<smem>>
    %c8 = arith.constant 8 : index
    %8 = memref.load %arg2[%c8] : memref<9xf32, #tpu.memory_space<smem>>
    %c0_0 = arith.constant 0 : index
    %c0_1 = arith.constant 0 : index
    %c0_2 = arith.constant 0 : index
    %9 = vector.load %arg1[%c0_0, %c0_1, %c0_2] : memref<2x8x128xf32, #tpu.memory_space<vmem>>, vector<1x8x128xf32>
    %10 = vector.shape_cast %9 : vector<1x8x128xf32> to vector<8x128xf32>
    %cst = arith.constant 3.14159274 : f32
    %11 = vector.broadcast %cst : f32 to vector<8x128xf32>
    %12 = arith.mulf %10, %11 : vector<8x128xf32>
    %c1_3 = arith.constant 1 : index
    %c0_4 = arith.constant 0 : index
    %c0_5 = arith.constant 0 : index
    %13 = vector.load %arg1[%c1_3, %c0_4, %c0_5] : memref<2x8x128xf32, #tpu.memory_space<vmem>>, vector<1x8x128xf32>
    %14 = vector.shape_cast %13 : vector<1x8x128xf32> to vector<8x128xf32>
    %cst_6 = arith.constant 3.14159274 : f32
    %15 = vector.broadcast %cst_6 : f32 to vector<8x128xf32>
    %16 = arith.mulf %14, %15 : vector<8x128xf32>
    %17 = math.cos %12 : vector<8x128xf32>
    %18 = math.sin %12 : vector<8x128xf32>
    %19 = math.cos %16 : vector<8x128xf32>
    %20 = math.sin %16 : vector<8x128xf32>
    %21 = vector.broadcast %1 : f32 to vector<8x128xf32>
    %22 = arith.mulf %21, %19 : vector<8x128xf32>
    %23 = vector.broadcast %0 : f32 to vector<8x128xf32>
    %24 = arith.addf %23, %22 : vector<8x128xf32>
    %25 = vector.broadcast %2 : f32 to vector<8x128xf32>
    %26 = arith.mulf %25, %20 : vector<8x128xf32>
    %27 = arith.addf %24, %26 : vector<8x128xf32>
    %28 = vector.broadcast %4 : f32 to vector<8x128xf32>
    %29 = arith.mulf %28, %19 : vector<8x128xf32>
    %30 = vector.broadcast %3 : f32 to vector<8x128xf32>
    %31 = arith.addf %30, %29 : vector<8x128xf32>
    %32 = vector.broadcast %5 : f32 to vector<8x128xf32>
    %33 = arith.mulf %32, %20 : vector<8x128xf32>
    %34 = arith.addf %31, %33 : vector<8x128xf32>
    %35 = vector.broadcast %7 : f32 to vector<8x128xf32>
    %36 = arith.mulf %35, %19 : vector<8x128xf32>
    %37 = vector.broadcast %6 : f32 to vector<8x128xf32>
    %38 = arith.addf %37, %36 : vector<8x128xf32>
    %39 = vector.broadcast %8 : f32 to vector<8x128xf32>
    %40 = arith.mulf %39, %20 : vector<8x128xf32>
    %41 = arith.addf %38, %40 : vector<8x128xf32>
    %42 = arith.mulf %17, %34 : vector<8x128xf32>
    %43 = arith.mulf %18, %41 : vector<8x128xf32>
    %44 = arith.addf %42, %43 : vector<8x128xf32>
    %45 = arith.addf %27, %44 : vector<8x128xf32>
    %c0_7 = arith.constant 0 : index
    %c0_8 = arith.constant 0 : index
    %46 = vector.load %arg3[%c0_7, %c0_8] : memref<8x128xf32, #tpu.memory_space<vmem>>, vector<8x128xf32>
    tpu.vector_store %arg3[%c0_7, %c0_8], %45 {strides = array<i32>} : memref<8x128xf32, #tpu.memory_space<vmem>>, vector<8x128xf32>,
    return
  }
  func.func @transform_0(%arg0: i32) -> (i32, i32, i32) {
    %c0_i32 = arith.constant 0 : i32
    %c0_i32_0 = arith.constant 0 : i32
    %c0_i32_1 = arith.constant 0 : i32
    return %c0_i32, %arg0, %c0_i32_0 : i32, i32, i32
  }
  func.func @transform_1(%arg0: i32) -> i32 {
    %c0_i32 = arith.constant 0 : i32
    %c0_i32_0 = arith.constant 0 : i32
    return %c0_i32 : i32
  }
  func.func @transform_2(%arg0: i32) -> (i32, i32) {
    %c0_i32 = arith.constant 0 : i32
    %c0_i32_0 = arith.constant 0 : i32
    return %arg0, %c0_i32 : i32, i32
  }
}

</mosaic_0001>

<llo_original>
// kernel: custom-call.1
$region0: #{custom-call.1}
  %s0 = inlined_call_operand.hbm [shape: c64[4,4], index: 0, kind: input, shape index: {}]
  %s1 = inlined_call_operand.vmem [shape: f32[4,4], index: 1, kind: output, shape index: {}]
  %s2 = scalar_lea.hbm %s0, 4
  $region1: #{custom-call.1} parent=0
    #allocation0 [shape = 's32[1]{0}', space=sflag, size = 0x4, scoped, tag = 'scoped memory for custom-call.1']
    %3 = vsyncpa [#allocation0], 0
    %s5 = sshll.u32 %s2, 4
    %s6 = int_to_ptr.hbm [resolvable:$true] %s5
    %s7 = sshll.u32 %s1, 4
    %s8 = int_to_ptr.vmem [resolvable:$true] %s7
    %10 = dma.hbm_to_vmem [thread:$0]  %s6, 64, %s8, [#allocation0]
    %12 = dma.done [#allocation0], 64
    %13 = vsyncpa [#allocation0], 1

// kernel: custom-call
$region0: #{custom-call}
  %s0 = inlined_call_operand.hbm [shape: c64[4,4], index: 0, kind: input, shape index: {}]
  %s1 = inlined_call_operand.vmem [shape: f32[4,4], index: 1, kind: output, shape index: {}]
  $region1: #{custom-call} parent=0
    #allocation0 [shape = 's32[1]{0}', space=sflag, size = 0x4, scoped, tag = 'scoped memory for custom-call']
    %2 = vsyncpa [#allocation0], 0
    %s4 = sshll.u32 %s0, 4
    %s5 = int_to_ptr.hbm [resolvable:$true] %s4
    %s6 = sshll.u32 %s1, 4
    %s7 = int_to_ptr.vmem [resolvable:$true] %s6
    %9 = dma.hbm_to_vmem [thread:$0]  %s5, 64, %s7, [#allocation0]
    %11 = dma.done [#allocation0], 64
    %12 = vsyncpa [#allocation0], 1

// kernel: hybrid_xor_forward.1
$region0: #{hybrid_xor_forward.1}
  #allocation0 [shape = 'u32[]', space=smem, size = 0x4, offset = 0x4, fixed_abs, tag = 'smem constant byte address 0x4 - core index']
  #allocation1 [shape = 'u32[72,128]{1,0:T(1,128)}', space=vmem, size = 0x9000, scoped, tag = 'internal scratch']
  %s0 = inlined_call_operand.vmem [shape: f32[2,32,128], index: 0, kind: input, shape index: {}]
  %s1 = inlined_call_operand.vmem [shape: f32[9], index: 1, kind: input, shape index: {}]
  %s2 = inlined_call_operand.hbm [shape: f32[32,128], index: 2, kind: output, shape index: {}]
  %s3 = sld [smem:[#allocation0]]
  $region83: #{hybrid_xor_forward.1} parent=0
    _
  %s5 = ssub.s32 1, %s3
  %s6 = scalar_select 0, %s5, %s3
  $region1: #{hybrid_xor_forward.1} parent=0
    #allocation2 [shape = 'u8[16384]{0}', space=vmem, size = 0x4000, scoped, tag = 'input window, operand 0']
    #allocation3 [shape = 'u8[512]{0}', space=smem, size = 0x200, scoped, tag = 'input window, operand 1, single buffered']
    #allocation4 [shape = 's32[2]{0}', space=sflag, size = 0x8, scoped, tag = 'scoped memory for hybrid_xor_forward.1']
    #allocation5 [shape = 's32[2]{0}', space=sflag, size = 0x8, scoped, tag = 'scoped memory for hybrid_xor_forward.1']
    #allocation6 [shape = 'u8[8192]{0}', space=vmem, size = 0x2000, scoped, tag = 'output window, operand 0']
    %7 = vsyncpa [#allocation5], 0
    %8 = vsyncpa [#allocation4], 0
    %s9 = scalar_lea.sflag [#allocation4], 1
    %10 = vsyncpa %s9, 0
    loop: start=0, step=1, limit=6
    $region2: #{hybrid_xor_forward.1} parent=1 // loop_pre_header
      _
    $region3: #{hybrid_xor_forward.1} parent=1 // loop_header
      %s12 = sphi 0, %s16
      %p13 = scmp.ge.s32.totalorder %s12, 6
      %s22 = sphi 0, %s24
      %s25 = sphi 0, %s22
      %s26 = sphi 0, %s25
      %s42 = sphi 0, %s26
      %s46 = sphi 0, %s46
      %s48 = sphi 0, %s46
      %s49 = sphi 0, %s48
      %s63 = sphi 0, %s49
      %s69 = sphi 0, %s71
      %s72 = sphi 0, %s69
      %s73 = sphi 0, %s72
      %s89 = sphi 0, %s73
    $region4: #{hybrid_xor_forward.1} parent=1 // loop_header_branch
      %15 = sbr.rel (%p13) target = $region8
    $region5: #{hybrid_xor_forward.1} parent=1 // loop_body
      %s17 = ssub.s32 %s12, 1
      %s18 = ssub.s32 %s12, 2
      %s19 = sadd.s32 %s12, 1
      %s20 = ssub.s32 %s12, %s19
      %p21 = scmp.eq.s32.totalorder %s20, 0
      %s23 = sadd.s32 %s22, 1
      %s24 = scalar_select %p21, %s22, %s23
      %p27 = pneg %p21
      %p28 = scmp.eq.s32.totalorder %s12, 3
      %p29 = por %p27, %p28
      %p30 = scmp.ne.s32.totalorder %s22, %s25
      %p31 = scmp.eq.s32.totalorder %s12, 0
      %p32 = por %p30, %p31
      %p33 = scmp.ne.s32.totalorder %s22, %s25
      %p34 = scmp.eq.s32.totalorder %s17, 3
      %p35 = por %p33, %p34
      %p36 = scmp.ne.s32.totalorder %s25, %s26
      %p37 = scmp.eq.s32.totalorder %s17, 0
      %p38 = por %p36, %p37
      %p39 = scmp.ne.s32.totalorder %s25, %s26
      %p40 = scmp.eq.s32.totalorder %s18, 3
      %p41 = por %p39, %p40
      %p43 = scmp.ne.s32.totalorder %s26, %s42
      %p44 = scmp.eq.s32.totalorder %s18, 0
      %p45 = por %p43, %p44
      %s47 = sadd.s32 %s46, 1
      %p50 = scmp.eq.s32.totalorder %s12, 3
      %p51 = scmp.ne.s32.totalorder %s46, %s48
      %p52 = scmp.eq.s32.totalorder %s12, 0
      %p53 = por %p51, %p52
      %p54 = scmp.ne.s32.totalorder %s46, %s48
      %p55 = scmp.eq.s32.totalorder %s17, 3
      %p56 = por %p54, %p55
      %p57 = scmp.ne.s32.totalorder %s48, %s49
      %p58 = scmp.eq.s32.totalorder %s17, 0
      %p59 = por %p57, %p58
      %p60 = scmp.ne.s32.totalorder %s48, %s49
      %p61 = scmp.eq.s32.totalorder %s18, 3
      %p62 = por %p60, %p61
      %p64 = scmp.ne.s32.totalorder %s49, %s63
      %p65 = scmp.eq.s32.totalorder %s18, 0
      %p66 = por %p64, %p65
      %s67 = ssub.s32 %s12, %s19
      %p68 = scmp.eq.s32.totalorder %s67, 0
      %s70 = sadd.s32 %s69, 1
      %s71 = scalar_select %p68, %s69, %s70
      %p74 = pneg %p68
      %p75 = scmp.eq.s32.totalorder %s12, 3
      %p76 = por %p74, %p75
      %p77 = scmp.ne.s32.totalorder %s69, %s72
      %p78 = scmp.eq.s32.totalorder %s12, 0
      %p79 = por %p77, %p78
      %p80 = scmp.ne.s32.totalorder %s69, %s72
      %p81 = scmp.eq.s32.totalorder %s17, 3
      %p82 = por %p80, %p81
      %p83 = scmp.ne.s32.totalorder %s72, %s73
      %p84 = scmp.eq.s32.totalorder %s17, 0
      %p85 = por %p83, %p84
      %p86 = scmp.ne.s32.totalorder %s72, %s73
      %p87 = scmp.eq.s32.totalorder %s18, 3
      %p88 = por %p86, %p87
      %p90 = scmp.ne.s32.totalorder %s73, %s89
      %p91 = scmp.eq.s32.totalorder %s18, 0
      %p92 = por %p90, %p91
      %p93 = scmp.le.s32.totalorder 1, %s12
      %p94 = scmp.lt.s32.totalorder %s12, 5
      %p95 = pnand %p93, %p94
      %p96 = pneg %p95
      // Predicated region
      $region9: #{hybrid_xor_forward.1} parent=5 // pred_check
        _
      $region10: #{hybrid_xor_forward.1} parent=5 // pred_check_branch
        %98 = sbr.rel (%p95) target = $region12
      $region11: #{hybrid_xor_forward.1} parent=5 // pred_region
        %s99 = ssub.s32 %s12, 1
        // Predicated region
        $region13: #{hybrid_xor_forward.1} parent=11 // pred_check
          %p100 = pneg %p59
        $region14: #{hybrid_xor_forward.1} parent=11 // pred_check_branch
          %102 = sbr.rel (%p100) target = $region16
        $region15: #{hybrid_xor_forward.1} parent=11 // pred_region
          %104 = vsyncadd [#allocation5], 0
          %s106 = sshll.u32 %s1, 4
          %s107 = int_to_ptr.vmem [resolvable:$true] %s106
          %109 = dma.vmem_to_smem %s107, 16, [#allocation3], [#allocation5]
        $region16: #{hybrid_xor_forward.1} parent=11 // pred_fallthru
          _
      $region12: #{hybrid_xor_forward.1} parent=5 // pred_fallthru
        _
      %p110 = scmp.lt.s32.totalorder %s12, 4
      // Predicated region
      $region17: #{hybrid_xor_forward.1} parent=5 // pred_check
        %p111 = pneg %p110
      $region18: #{hybrid_xor_forward.1} parent=5 // pred_check_branch
        %113 = sbr.rel (%p111) target = $region20
      $region19: #{hybrid_xor_forward.1} parent=5 // pred_region
        // Predicated region
        $region21: #{hybrid_xor_forward.1} parent=19 // pred_check
          %p114 = pneg %p32
        $region22: #{hybrid_xor_forward.1} parent=19 // pred_check_branch
          %116 = sbr.rel (%p114) target = $region24
        $region23: #{hybrid_xor_forward.1} parent=19 // pred_region
          %s117 = sand.u32 %s22, 1
          %s118 = sand.u32 %s22, 1
          %s119 = smul.addr %s118, 16
          %s120 = scalar_lea.vmem [#allocation2], %s119
          %s121 = smul.addr %s12, 8
          %s122 = scalar_lea.vmem %s0, %s121
          // Predicated region
          $region25: #{hybrid_xor_forward.1} parent=23 // pred_check
            _
          $region26: #{hybrid_xor_forward.1} parent=23 // pred_check_branch
            %124 = sbr.rel (0) target = $region28
          $region27: #{hybrid_xor_forward.1} parent=23 // pred_region
            // Predicated region
            $region29: #{hybrid_xor_forward.1} parent=27 // pred_check
              _
            $region30: #{hybrid_xor_forward.1} parent=27 // pred_check_branch
              %126 = sbr.rel (0) target = $region32
            $region31: #{hybrid_xor_forward.1} parent=27 // pred_region
              // Predicated region
              $region44: #{hybrid_xor_forward.1} parent=31 // pred_check
                _
              $region45: #{hybrid_xor_forward.1} parent=31 // pred_check_branch
                %144 = sbr.rel (0) target = $region47
              $region46: #{hybrid_xor_forward.1} parent=31 // pred_region
                loop: start=0, step=1, limit=1
                $region48: #{hybrid_xor_forward.1} parent=46 // loop_pre_header
                  _
                $region49: #{hybrid_xor_forward.1} parent=46 // loop_header
                  %s146 = sphi 0, %s150
                  %p147 = scmp.ge.s32.totalorder %s146, 1
                  %s151 = sphi %s122, %s122
                  %s152 = sphi %s120, %s120
                $region50: #{hybrid_xor_forward.1} parent=46 // loop_header_branch
                  %149 = sbr.rel (%p147) target = $region54
                $region51: #{hybrid_xor_forward.1} parent=46 // loop_body
                  %v153 = vld [vmem:[%s151] sm:$0xff]
                  %154 = vst [vmem:[%s152] sm:$0xff] %v153
                  %v155 = vld [vmem:[%s151 + $0x20] sm:$0xff]
                  %156 = vst [vmem:[%s152 + $0x8] sm:$0xff] %v155
                $region52: #{hybrid_xor_forward.1} parent=46 // loop_footer
                  %s150 = sadd.s32 1, %s146
                $region53: #{hybrid_xor_forward.1} parent=46 // loop_footer_branch
                  %145 = sbr.rel target = $region49
                $region54: #{hybrid_xor_forward.1} parent=46 // loop_exit
                  _
              $region47: #{hybrid_xor_forward.1} parent=31 // pred_fallthru
                _
              // Predicated region
              $region55: #{hybrid_xor_forward.1} parent=31 // pred_check
                _
              $region56: #{hybrid_xor_forward.1} parent=31 // pred_check_branch
                %158 = sbr.rel target = $region58
              $region57: #{hybrid_xor_forward.1} parent=31 // pred_region
                _
              $region58: #{hybrid_xor_forward.1} parent=31 // pred_fallthru
                _
            $region32: #{hybrid_xor_forward.1} parent=27 // pred_fallthru
              _
            // Predicated region
            $region33: #{hybrid_xor_forward.1} parent=27 // pred_check
              _
            $region34: #{hybrid_xor_forward.1} parent=27 // pred_check_branch
              %128 = sbr.rel target = $region36
            $region35: #{hybrid_xor_forward.1} parent=27 // pred_region
              %s130 = ssub.s32 256, 1
              loop: start=0, step=1, limit=1
              $region37: #{hybrid_xor_forward.1} parent=35 // loop_pre_header
                _
              $region38: #{hybrid_xor_forward.1} parent=35 // loop_header
                %s132 = sphi 0, %s136
                %p133 = scmp.ge.s32.totalorder %s132, 1
                %s137 = sphi %s122, %s122
                %s138 = sphi %s120, %s120
              $region39: #{hybrid_xor_forward.1} parent=35 // loop_header_branch
                %135 = sbr.rel (%p133) target = $region43
              $region40: #{hybrid_xor_forward.1} parent=35 // loop_body
                %v139 = vld [vmem:[%s137] sm:%s130]
                %140 = vst [vmem:[%s138] sm:%s130] %v139
                %v141 = vld [vmem:[%s137 + $0x20] sm:%s130]
                %142 = vst [vmem:[%s138 + $0x8] sm:%s130] %v141
              $region41: #{hybrid_xor_forward.1} parent=35 // loop_footer
                %s136 = sadd.s32 1, %s132
              $region42: #{hybrid_xor_forward.1} parent=35 // loop_footer_branch
                %131 = sbr.rel target = $region38
              $region43: #{hybrid_xor_forward.1} parent=35 // loop_exit
                _
            $region36: #{hybrid_xor_forward.1} parent=27 // pred_fallthru
              _
          $region28: #{hybrid_xor_forward.1} parent=23 // pred_fallthru
            _
          %159 = vnop
        $region24: #{hybrid_xor_forward.1} parent=19 // pred_fallthru
          _
      $region20: #{hybrid_xor_forward.1} parent=5 // pred_fallthru
        _
      %p160 = scmp.le.s32.totalorder 1, %s12
      %p161 = scmp.lt.s32.totalorder %s12, 5
      %p162 = pnand %p160, %p161
      %p163 = pneg %p162
      // Predicated region
      $region59: #{hybrid_xor_forward.1} parent=5 // pred_check
        _
      $region60: #{hybrid_xor_forward.1} parent=5 // pred_check_branch
        %165 = sbr.rel (%p162) target = $region62
      $region61: #{hybrid_xor_forward.1} parent=5 // pred_region
        %s166 = ssub.s32 %s12, 1
        %s167 = sand.u32 %s25, 1
        %s168 = sand.u32 %s25, 1
        %s169 = smul.addr %s168, 16
        %s170 = scalar_lea.vmem [#allocation2], %s169
        // Predicated region
        $region63: #{hybrid_xor_forward.1} parent=61 // pred_check
          %p171 = pneg %p38
        $region64: #{hybrid_xor_forward.1} parent=61 // pred_check_branch
          %173 = sbr.rel (%p171) target = $region66
        $region65: #{hybrid_xor_forward.1} parent=61 // pred_region
          _
        $region66: #{hybrid_xor_forward.1} parent=61 // pred_fallthru
          _
        // Predicated region
        $region67: #{hybrid_xor_forward.1} parent=61 // pred_check
          %p174 = pneg %p59
        $region68: #{hybrid_xor_forward.1} parent=61 // pred_check_branch
          %176 = sbr.rel (%p174) target = $region70
        $region69: #{hybrid_xor_forward.1} parent=61 // pred_region
          %178 = dma.done [#allocation5], 16
        $region70: #{hybrid_xor_forward.1} parent=61 // pred_fallthru
          _
        %179 = sfence
        %s180 = sand.u32 %s25, 1
        %s181 = sand.u32 %s25, 1
        %s182 = smul.addr %s181, 16
        %s183 = scalar_lea.vmem [#allocation2], %s182
        %p184 = pneg %p38
        %p185 = pneg %p35
        %p186 = pneg %p59
        %p187 = pneg %p56
        %p188 = pneg %p85
        %p189 = pneg %p82
        %s190 = sand.u32 %s72, 1
        %s191 = scalar_lea.sflag [#allocation4], %s190
        %s192 = sand.u32 %s72, 1
        %s193 = smul.addr %s192, 8
        %s194 = scalar_lea.vmem [#allocation6], %s193
        %s195 = sld [smem:[#allocation3]]
        %s196 = sld [smem:[#allocation3 + $0x1]]
        %s197 = sld [smem:[#allocation3 + $0x2]]
        %s198 = sld [smem:[#allocation3 + $0x3]]
        %s199 = sld [smem:[#allocation3 + $0x4]]
        %s200 = sld [smem:[#allocation3 + $0x5]]
        %s201 = sld [smem:[#allocation3 + $0x6]]
        %s202 = sld [smem:[#allocation3 + $0x7]]
        %s203 = sld [smem:[#allocation3 + $0x8]]
        %v204 = vld [vmem:[%s170] sm:$0xff]
        %v205 = vmul.f32 %v204, 3.1415927
        %s206 = scalar_lea.vmem %s170, 8 [#allocation2]
        %v207 = vld [vmem:[%s206] sm:$0xff]
        %v208 = vmul.f32 %v207, 3.1415927
        %v209 = vand.u32 2147483647, %v205
        %vm210 = vcmp.le.f32.partialorder %v209, 0.7853982
        %vm211 = vcmp.lt.s32.totalorder %v205, 0
        %v212 = vand.u32 %v205, 2139095040
        %v213 = vshrl.u32 %v212, 23
        %v214 = vsub.s32 %v213, 127
        %v215 = vand.u32 2147483647, %v205
        %v216 = vand.u32 %v215, 8388607
        %v217 = vor.u32 %v216, 8388608
        %v218 = vsub.s32 0, %v217
        %v219 = vadd.s32 %v214, 1
        %vm220 = vcmp.gt.s32.totalorder %v219, 0
        %v221 = vsel %vm220, %v219, 0
        %v222 = vshrl.u32 %v221, 5
        %v223 = vand.u32 %v221, 31
        %v224 = vsub.s32 32, %v223
        %v225 = vshrl.u32 683565275, %v224
        %v226 = vshll.u32 683565275, %v223
        %v227 = vshrl.u32 2475754826, %v224
        %v228 = vor.u32 %v226, %v227
        %v229 = vshll.u32 2475754826, %v223
        %v230 = vshrl.u32 2131351028, %v224
        %v231 = vor.u32 %v229, %v230
        %v232 = vshll.u32 2131351028, %v223
        %v233 = vshrl.u32 2102212464, %v224
        %v234 = vor.u32 %v232, %v233
        %v235 = vshll.u32 2102212464, %v223
        %v236 = vshrl.u32 920167782, %v224
        %v237 = vor.u32 %v235, %v236
        %v238 = vshll.u32 920167782, %v223
        %v239 = vshrl.u32 1326507024, %v224
        %v240 = vor.u32 %v238, %v239
        %vm241 = vcmp.lt.s32.totalorder %v222, 1
        %vm242 = vcmp.lt.s32.totalorder %v222, 2
        %vm243 = vcmp.lt.s32.totalorder %v222, 3
        %vm244 = vcmp.lt.s32.totalorder %v222, 4
        %v245 = vsel %vm241, %v225, %v228
        %v246 = vsel %vm244, %v234, 2102212464
        %v247 = vsel %vm243, %v231, %v246
        %v248 = vsel %vm242, %v245, %v247
        %v249 = vsel %vm241, %v228, %v231
        %v250 = vsel %vm244, %v237, 920167782
        %v251 = vsel %vm243, %v234, %v250
        %v252 = vsel %vm242, %v249, %v251
        %v253 = vsel %vm241, %v231, %v234
        %v254 = vsel %vm244, %v240, 1326507024
        %v255 = vsel %vm243, %v237, %v254
        %v256 = vsel %vm242, %v253, %v255
        %v257 = vshll.u32 %v217, 8
        %v258 = vand.u32 %v257, 65535
        %v259 = vshrl.u32 %v257, 16
        %v260 = vand.u32 %v256, 65535
        %v261 = vshrl.u32 %v256, 16
        %v262 = vmul.u32 %v258, %v260
        %v263 = vmul.u32 %v258, %v261
        %v264 = vmul.u32 %v259, %v260
        %v265 = vmul.u32 %v259, %v261
        %v266 = vshll.u32 %v263, 16
        %v267 = vshrl.u32 %v263, 16
        %v268 = vshll.u32 %v264, 16
        %v269 = vshrl.u32 %v264, 16
        %vm270 = vc.u32 %v262, %v266
        %v271 = vsel %vm270, 1, 0
        %v272 = vadd.s32 %v262, %v266
        %v273 = vadd.s32 %v265, %v271
        %vm274 = vc.u32 %v272, %v268
        %v275 = vsel %vm274, 1, 0
        %v276 = vadd.s32 %v272, %v268
        %v277 = vadd.s32 %v273, %v275
        %v278 = vadd.s32 %v277, %v267
        %v279 = vadd.s32 %v278, %v269
        %v280 = vand.u32 %v257, 65535
        %v281 = vshrl.u32 %v257, 16
        %v282 = vand.u32 %v252, 65535
        %v283 = vshrl.u32 %v252, 16
        %v284 = vmul.u32 %v280, %v282
        %v285 = vmul.u32 %v280, %v283
        %v286 = vmul.u32 %v281, %v282
        %v287 = vmul.u32 %v281, %v283
        %v288 = vshll.u32 %v285, 16
        %v289 = vshrl.u32 %v285, 16
        %v290 = vshll.u32 %v286, 16
        %v291 = vshrl.u32 %v286, 16
        %vm292 = vc.u32 %v284, %v288
        %v293 = vsel %vm292, 1, 0
        %v294 = vadd.s32 %v284, %v288
        %v295 = vadd.s32 %v287, %v293
        %vm296 = vc.u32 %v294, %v290
        %v297 = vsel %vm296, 1, 0
        %v298 = vadd.s32 %v294, %v290
        %v299 = vadd.s32 %v295, %v297
        %v300 = vadd.s32 %v299, %v289
        %v301 = vadd.s32 %v300, %v291
        %v302 = vmul.u32 %v257, %v248
        %v303 = vadd.s32 %v279, %v298
        %vm304 = vc.u32 %v279, %v298
        %v305 = vadd.s32 %v301, 1
        %v306 = vsel %vm304, %v305, %v301
        %v307 = vadd.s32 %v302, %v306
        %v308 = vadd.s32 %v307, 536870912
        %v309 = vshrl.u32 %v308, 30
        %v310 = vshll.u32 %v309, 30
        %v311 = vsub.s32 %v307, %v310
        %vm312 = vcmp.lt.s32.totalorder %v311, 0
        %v313 = vsub.s32 0, %v311
        %v314 = vsel %vm312, %v313, %v311
        %v315 = vclz %v314
        %v316 = vsub.s32 %v315, 2
        %vm317 = vcmp.gt.s32.totalorder 0, %v316
        %v318 = vsel %vm317, 0, %v316
        %v319 = vsub.s32 32, %v318
        %v320 = vshll.u32 %v311, %v318
        %v321 = vshrl.u32 %v303, %v319
        %v322 = vor.u32 %v320, %v321
        %v323 = vsub.s32 4294967266, %v318
        %v324 = vadd.s32 %v323, 127
        %v325 = vshll.u32 %v324, 23
        %v326 = vor.u32 4788187, %v325
        %v327 = vand.u32 2147483647, %v326
        %v329 = vcvt.s32.f32 %v322
        %v330 = vmul.f32 %v329, %v327
        %v331 = vxor.u32 %v330, 2147483648
        %v332 = vsel %vm211, %v331, %v330
        %v333 = vsub.s32 4, %v309
        %v334 = vsel %vm211, %v333, %v309
        %v335 = vsel %vm210, %v205, %v332
        %v336 = vsel %vm210, 0, %v334
        %v337 = vmul.f32 %v335, %v335
        %v338 = vmul.f32 %v337, -0.001358992
        %v339 = vadd.f32 %v338, 0.041655596
        %v340 = vmul.f32 %v337, %v339
        %v341 = vadd.f32 %v340, -0.4999988
        %v342 = vmul.f32 %v337, %v341
        %v343 = vadd.f32 1.0, %v342
        %v344 = vmul.f32 %v335, %v335
        %v345 = vmul.f32 %v344, -0.00019511016
        %v346 = vadd.f32 %v345, 0.008332121
        %v347 = vmul.f32 %v344, %v346
        %v348 = vadd.f32 %v347, -0.16666654
        %v349 = vmul.f32 %v344, %v348
        %v350 = vadd.f32 %v349, 1.0
        %v351 = vmul.f32 %v350, %v335
        %vm352 = vweird.f32 %v205
        %v353 = vand.u32 %v336, 3
        %vm354 = vcmp.lt.s32.totalorder %v353, 2
        %vm355 = vcmp.eq.s32.totalorder %v353, 0
        %v356 = vxor.u32 %v351, 2147483648
        %v357 = vsel %vm355, %v343, %v356
        %vm358 = vcmp.eq.s32.totalorder %v353, 2
        %v359 = vxor.u32 %v343, 2147483648
        %v360 = vsel %vm358, %v359, %v351
        %v361 = vsel %vm354, %v357, %v360
        %v362 = vsel %vm352, nan, %v361
        %v363 = vand.u32 2147483647, %v205
        %vm364 = vcmp.le.f32.partialorder %v363, 0.7853982
        %vm365 = vcmp.lt.s32.totalorder %v205, 0
        %v366 = vand.u32 %v205, 2139095040
        %v367 = vshrl.u32 %v366, 23
        %v368 = vsub.s32 %v367, 127
        %v369 = vand.u32 2147483647, %v205
        %v370 = vand.u32 %v369, 8388607
        %v371 = vor.u32 %v370, 8388608
        %v372 = vsub.s32 0, %v371
        %v373 = vadd.s32 %v368, 1
        %vm374 = vcmp.gt.s32.totalorder %v373, 0
        %v375 = vsel %vm374, %v373, 0
        %v376 = vshrl.u32 %v375, 5
        %v377 = vand.u32 %v375, 31
        %v378 = vsub.s32 32, %v377
        %v379 = vshrl.u32 683565275, %v378
        %v380 = vshll.u32 683565275, %v377
        %v381 = vshrl.u32 2475754826, %v378
        %v382 = vor.u32 %v380, %v381
        %v383 = vshll.u32 2475754826, %v377
        %v384 = vshrl.u32 2131351028, %v378
        %v385 = vor.u32 %v383, %v384
        %v386 = vshll.u32 2131351028, %v377
        %v387 = vshrl.u32 2102212464, %v378
        %v388 = vor.u32 %v386, %v387
        %v389 = vshll.u32 2102212464, %v377
        %v390 = vshrl.u32 920167782, %v378
        %v391 = vor.u32 %v389, %v390
        %v392 = vshll.u32 920167782, %v377
        %v393 = vshrl.u32 1326507024, %v378
        %v394 = vor.u32 %v392, %v393
        %vm395 = vcmp.lt.s32.totalorder %v376, 1
        %vm396 = vcmp.lt.s32.totalorder %v376, 2
        %vm397 = vcmp.lt.s32.totalorder %v376, 3
        %vm398 = vcmp.lt.s32.totalorder %v376, 4
        %v399 = vsel %vm395, %v379, %v382
        %v400 = vsel %vm398, %v388, 2102212464
        %v401 = vsel %vm397, %v385, %v400
        %v402 = vsel %vm396, %v399, %v401
        %v403 = vsel %vm395, %v382, %v385
        %v404 = vsel %vm398, %v391, 920167782
        %v405 = vsel %vm397, %v388, %v404
        %v406 = vsel %vm396, %v403, %v405
        %v407 = vsel %vm395, %v385, %v388
        %v408 = vsel %vm398, %v394, 1326507024
        %v409 = vsel %vm397, %v391, %v408
        %v410 = vsel %vm396, %v407, %v409
        %v411 = vshll.u32 %v371, 8
        %v412 = vand.u32 %v411, 65535
        %v413 = vshrl.u32 %v411, 16
        %v414 = vand.u32 %v410, 65535
        %v415 = vshrl.u32 %v410, 16
        %v416 = vmul.u32 %v412, %v414
        %v417 = vmul.u32 %v412, %v415
        %v418 = vmul.u32 %v413, %v414
        %v419 = vmul.u32 %v413, %v415
        %v420 = vshll.u32 %v417, 16
        %v421 = vshrl.u32 %v417, 16
        %v422 = vshll.u32 %v418, 16
        %v423 = vshrl.u32 %v418, 16
        %vm424 = vc.u32 %v416, %v420
        %v425 = vsel %vm424, 1, 0
        %v426 = vadd.s32 %v416, %v420
        %v427 = vadd.s32 %v419, %v425
        %vm428 = vc.u32 %v426, %v422
        %v429 = vsel %vm428, 1, 0
        %v430 = vadd.s32 %v426, %v422
        %v431 = vadd.s32 %v427, %v429
        %v432 = vadd.s32 %v431, %v421
        %v433 = vadd.s32 %v432, %v423
        %v434 = vand.u32 %v411, 65535
        %v435 = vshrl.u32 %v411, 16
        %v436 = vand.u32 %v406, 65535
        %v437 = vshrl.u32 %v406, 16
        %v438 = vmul.u32 %v434, %v436
        %v439 = vmul.u32 %v434, %v437
        %v440 = vmul.u32 %v435, %v436
        %v441 = vmul.u32 %v435, %v437
        %v442 = vshll.u32 %v439, 16
        %v443 = vshrl.u32 %v439, 16
        %v444 = vshll.u32 %v440, 16
        %v445 = vshrl.u32 %v440, 16
        %vm446 = vc.u32 %v438, %v442
        %v447 = vsel %vm446, 1, 0
        %v448 = vadd.s32 %v438, %v442
        %v449 = vadd.s32 %v441, %v447
        %vm450 = vc.u32 %v448, %v444
        %v451 = vsel %vm450, 1, 0
        %v452 = vadd.s32 %v448, %v444
        %v453 = vadd.s32 %v449, %v451
        %v454 = vadd.s32 %v453, %v443
        %v455 = vadd.s32 %v454, %v445
        %v456 = vmul.u32 %v411, %v402
        %v457 = vadd.s32 %v433, %v452
        %vm458 = vc.u32 %v433, %v452
        %v459 = vadd.s32 %v455, 1
        %v460 = vsel %vm458, %v459, %v455
        %v461 = vadd.s32 %v456, %v460
        %v462 = vadd.s32 %v461, 536870912
        %v463 = vshrl.u32 %v462, 30
        %v464 = vshll.u32 %v463, 30
        %v465 = vsub.s32 %v461, %v464
        %vm466 = vcmp.lt.s32.totalorder %v465, 0
        %v467 = vsub.s32 0, %v465
        %v468 = vsel %vm466, %v467, %v465
        %v469 = vclz %v468
        %v470 = vsub.s32 %v469, 2
        %vm471 = vcmp.gt.s32.totalorder 0, %v470
        %v472 = vsel %vm471, 0, %v470
        %v473 = vsub.s32 32, %v472
        %v474 = vshll.u32 %v465, %v472
        %v475 = vshrl.u32 %v457, %v473
        %v476 = vor.u32 %v474, %v475
        %v477 = vsub.s32 4294967266, %v472
        %v478 = vadd.s32 %v477, 127
        %v479 = vshll.u32 %v478, 23
        %v480 = vor.u32 4788187, %v479
        %v481 = vand.u32 2147483647, %v480
        %v483 = vcvt.s32.f32 %v476
        %v484 = vmul.f32 %v483, %v481
        %v485 = vxor.u32 %v484, 2147483648
        %v486 = vsel %vm365, %v485, %v484
        %v487 = vsub.s32 4, %v463
        %v488 = vsel %vm365, %v487, %v463
        %v489 = vsel %vm364, %v205, %v486
        %v490 = vsel %vm364, 0, %v488
        %v491 = vmul.f32 %v489, %v489
        %v492 = vmul.f32 %v491, -0.001358992
        %v493 = vadd.f32 %v492, 0.041655596
        %v494 = vmul.f32 %v491, %v493
        %v495 = vadd.f32 %v494, -0.4999988
        %v496 = vmul.f32 %v491, %v495
        %v497 = vadd.f32 1.0, %v496
        %v498 = vmul.f32 %v489, %v489
        %v499 = vmul.f32 %v498, -0.00019511016
        %v500 = vadd.f32 %v499, 0.008332121
        %v501 = vmul.f32 %v498, %v500
        %v502 = vadd.f32 %v501, -0.16666654
        %v503 = vmul.f32 %v498, %v502
        %v504 = vadd.f32 %v503, 1.0
        %v505 = vmul.f32 %v504, %v489
        %vm506 = vweird.f32 %v205
        %v507 = vadd.s32 %v490, 3
        %v508 = vand.u32 %v507, 3
        %vm509 = vcmp.lt.s32.totalorder %v508, 2
        %vm510 = vcmp.eq.s32.totalorder %v508, 0
        %v511 = vxor.u32 %v505, 2147483648
        %v512 = vsel %vm510, %v497, %v511
        %vm513 = vcmp.eq.s32.totalorder %v508, 2
        %v514 = vxor.u32 %v497, 2147483648
        %v515 = vsel %vm513, %v514, %v505
        %v516 = vsel %vm509, %v512, %v515
        %v517 = vsel %vm506, nan, %v516
        %v518 = vand.u32 2147483647, %v208
        %vm519 = vcmp.le.f32.partialorder %v518, 0.7853982
        %vm520 = vcmp.lt.s32.totalorder %v208, 0
        %v521 = vand.u32 %v208, 2139095040
        %v522 = vshrl.u32 %v521, 23
        %v523 = vsub.s32 %v522, 127
        %v524 = vand.u32 2147483647, %v208
        %v525 = vand.u32 %v524, 8388607
        %v526 = vor.u32 %v525, 8388608
        %v527 = vsub.s32 0, %v526
        %v528 = vadd.s32 %v523, 1
        %vm529 = vcmp.gt.s32.totalorder %v528, 0
        %v530 = vsel %vm529, %v528, 0
        %v531 = vshrl.u32 %v530, 5
        %v532 = vand.u32 %v530, 31
        %v533 = vsub.s32 32, %v532
        %v534 = vshrl.u32 683565275, %v533
        %v535 = vshll.u32 683565275, %v532
        %v536 = vshrl.u32 2475754826, %v533
        %v537 = vor.u32 %v535, %v536
        %v538 = vshll.u32 2475754826, %v532
        %v539 = vshrl.u32 2131351028, %v533
        %v540 = vor.u32 %v538, %v539
        %v541 = vshll.u32 2131351028, %v532
        %v542 = vshrl.u32 2102212464, %v533
        %v543 = vor.u32 %v541, %v542
        %v544 = vshll.u32 2102212464, %v532
        %v545 = vshrl.u32 920167782, %v533
        %v546 = vor.u32 %v544, %v545
        %v547 = vshll.u32 920167782, %v532
        %v548 = vshrl.u32 1326507024, %v533
        %v549 = vor.u32 %v547, %v548
        %vm550 = vcmp.lt.s32.totalorder %v531, 1
        %vm551 = vcmp.lt.s32.totalorder %v531, 2
        %vm552 = vcmp.lt.s32.totalorder %v531, 3
        %vm553 = vcmp.lt.s32.totalorder %v531, 4
        %v554 = vsel %vm550, %v534, %v537
        %v555 = vsel %vm553, %v543, 2102212464
        %v556 = vsel %vm552, %v540, %v555
        %v557 = vsel %vm551, %v554, %v556
        %v558 = vsel %vm550, %v537, %v540
        %v559 = vsel %vm553, %v546, 920167782
        %v560 = vsel %vm552, %v543, %v559
        %v561 = vsel %vm551, %v558, %v560
        %v562 = vsel %vm550, %v540, %v543
        %v563 = vsel %vm553, %v549, 1326507024
        %v564 = vsel %vm552, %v546, %v563
        %v565 = vsel %vm551, %v562, %v564
        %v566 = vshll.u32 %v526, 8
        %v567 = vand.u32 %v566, 65535
        %v568 = vshrl.u32 %v566, 16
        %v569 = vand.u32 %v565, 65535
        %v570 = vshrl.u32 %v565, 16
        %v571 = vmul.u32 %v567, %v569
        %v572 = vmul.u32 %v567, %v570
        %v573 = vmul.u32 %v568, %v569
        %v574 = vmul.u32 %v568, %v570
        %v575 = vshll.u32 %v572, 16
        %v576 = vshrl.u32 %v572, 16
        %v577 = vshll.u32 %v573, 16
        %v578 = vshrl.u32 %v573, 16
        %vm579 = vc.u32 %v571, %v575
        %v580 = vsel %vm579, 1, 0
        %v581 = vadd.s32 %v571, %v575
        %v582 = vadd.s32 %v574, %v580
        %vm583 = vc.u32 %v581, %v577
        %v584 = vsel %vm583, 1, 0
        %v585 = vadd.s32 %v581, %v577
        %v586 = vadd.s32 %v582, %v584
        %v587 = vadd.s32 %v586, %v576
        %v588 = vadd.s32 %v587, %v578
        %v589 = vand.u32 %v566, 65535
        %v590 = vshrl.u32 %v566, 16
        %v591 = vand.u32 %v561, 65535
        %v592 = vshrl.u32 %v561, 16
        %v593 = vmul.u32 %v589, %v591
        %v594 = vmul.u32 %v589, %v592
        %v595 = vmul.u32 %v590, %v591
        %v596 = vmul.u32 %v590, %v592
        %v597 = vshll.u32 %v594, 16
        %v598 = vshrl.u32 %v594, 16
        %v599 = vshll.u32 %v595, 16
        %v600 = vshrl.u32 %v595, 16
        %vm601 = vc.u32 %v593, %v597
        %v602 = vsel %vm601, 1, 0
        %v603 = vadd.s32 %v593, %v597
        %v604 = vadd.s32 %v596, %v602
        %vm605 = vc.u32 %v603, %v599
        %v606 = vsel %vm605, 1, 0
        %v607 = vadd.s32 %v603, %v599
        %v608 = vadd.s32 %v604, %v606
        %v609 = vadd.s32 %v608, %v598
        %v610 = vadd.s32 %v609, %v600
        %v611 = vmul.u32 %v566, %v557
        %v612 = vadd.s32 %v588, %v607
        %vm613 = vc.u32 %v588, %v607
        %v614 = vadd.s32 %v610, 1
        %v615 = vsel %vm613, %v614, %v610
        %v616 = vadd.s32 %v611, %v615
        %v617 = vadd.s32 %v616, 536870912
        %v618 = vshrl.u32 %v617, 30
        %v619 = vshll.u32 %v618, 30
        %v620 = vsub.s32 %v616, %v619
        %vm621 = vcmp.lt.s32.totalorder %v620, 0
        %v622 = vsub.s32 0, %v620
        %v623 = vsel %vm621, %v622, %v620
        %v624 = vclz %v623
        %v625 = vsub.s32 %v624, 2
        %vm626 = vcmp.gt.s32.totalorder 0, %v625
        %v627 = vsel %vm626, 0, %v625
        %v628 = vsub.s32 32, %v627
        %v629 = vshll.u32 %v620, %v627
        %v630 = vshrl.u32 %v612, %v628
        %v631 = vor.u32 %v629, %v630
        %v632 = vsub.s32 4294967266, %v627
        %v633 = vadd.s32 %v632, 127
        %v634 = vshll.u32 %v633, 23
        %v635 = vor.u32 4788187, %v634
        %v636 = vand.u32 2147483647, %v635
        %v638 = vcvt.s32.f32 %v631
        %v639 = vmul.f32 %v638, %v636
        %v640 = vxor.u32 %v639, 2147483648
        %v641 = vsel %vm520, %v640, %v639
        %v642 = vsub.s32 4, %v618
        %v643 = vsel %vm520, %v642, %v618
        %v644 = vsel %vm519, %v208, %v641
        %v645 = vsel %vm519, 0, %v643
        %v646 = vmul.f32 %v644, %v644
        %v647 = vmul.f32 %v646, -0.001358992
        %v648 = vadd.f32 %v647, 0.041655596
        %v649 = vmul.f32 %v646, %v648
        %v650 = vadd.f32 %v649, -0.4999988
        %v651 = vmul.f32 %v646, %v650
        %v652 = vadd.f32 1.0, %v651
        %v653 = vmul.f32 %v644, %v644
        %v654 = vmul.f32 %v653, -0.00019511016
        %v655 = vadd.f32 %v654, 0.008332121
        %v656 = vmul.f32 %v653, %v655
        %v657 = vadd.f32 %v656, -0.16666654
        %v658 = vmul.f32 %v653, %v657
        %v659 = vadd.f32 %v658, 1.0
        %v660 = vmul.f32 %v659, %v644
        %vm661 = vweird.f32 %v208
        %v662 = vand.u32 %v645, 3
        %vm663 = vcmp.lt.s32.totalorder %v662, 2
        %vm664 = vcmp.eq.s32.totalorder %v662, 0
        %v665 = vxor.u32 %v660, 2147483648
        %v666 = vsel %vm664, %v652, %v665
        %vm667 = vcmp.eq.s32.totalorder %v662, 2
        %v668 = vxor.u32 %v652, 2147483648
        %v669 = vsel %vm667, %v668, %v660
        %v670 = vsel %vm663, %v666, %v669
        %v671 = vsel %vm661, nan, %v670
        %v672 = vand.u32 2147483647, %v208
        %vm673 = vcmp.le.f32.partialorder %v672, 0.7853982
        %vm674 = vcmp.lt.s32.totalorder %v208, 0
        %v675 = vand.u32 %v208, 2139095040
        %v676 = vshrl.u32 %v675, 23
        %v677 = vsub.s32 %v676, 127
        %v678 = vand.u32 2147483647, %v208
        %v679 = vand.u32 %v678, 8388607
        %v680 = vor.u32 %v679, 8388608
        %v681 = vsub.s32 0, %v680
        %v682 = vadd.s32 %v677, 1
        %vm683 = vcmp.gt.s32.totalorder %v682, 0
        %v684 = vsel %vm683, %v682, 0
        %v685 = vshrl.u32 %v684, 5
        %v686 = vand.u32 %v684, 31
        %v687 = vsub.s32 32, %v686
        %v688 = vshrl.u32 683565275, %v687
        %v689 = vshll.u32 683565275, %v686
        %v690 = vshrl.u32 2475754826, %v687
        %v691 = vor.u32 %v689, %v690
        %v692 = vshll.u32 2475754826, %v686
        %v693 = vshrl.u32 2131351028, %v687
        %v694 = vor.u32 %v692, %v693
        %v695 = vshll.u32 2131351028, %v686
        %v696 = vshrl.u32 2102212464, %v687
        %v697 = vor.u32 %v695, %v696
        %v698 = vshll.u32 2102212464, %v686
        %v699 = vshrl.u32 920167782, %v687
        %v700 = vor.u32 %v698, %v699
        %v701 = vshll.u32 920167782, %v686
        %v702 = vshrl.u32 1326507024, %v687
        %v703 = vor.u32 %v701, %v702
        %vm704 = vcmp.lt.s32.totalorder %v685, 1
        %vm705 = vcmp.lt.s32.totalorder %v685, 2
        %vm706 = vcmp.lt.s32.totalorder %v685, 3
        %vm707 = vcmp.lt.s32.totalorder %v685, 4
        %v708 = vsel %vm704, %v688, %v691
        %v709 = vsel %vm707, %v697, 2102212464
        %v710 = vsel %vm706, %v694, %v709
        %v711 = vsel %vm705, %v708, %v710
        %v712 = vsel %vm704, %v691, %v694
        %v713 = vsel %vm707, %v700, 920167782
        %v714 = vsel %vm706, %v697, %v713
        %v715 = vsel %vm705, %v712, %v714
        %v716 = vsel %vm704, %v694, %v697
        %v717 = vsel %vm707, %v703, 1326507024
        %v718 = vsel %vm706, %v700, %v717
        %v719 = vsel %vm705, %v716, %v718
        %v720 = vshll.u32 %v680, 8
        %v721 = vand.u32 %v720, 65535
        %v722 = vshrl.u32 %v720, 16
        %v723 = vand.u32 %v719, 65535
        %v724 = vshrl.u32 %v719, 16
        %v725 = vmul.u32 %v721, %v723
        %v726 = vmul.u32 %v721, %v724
        %v727 = vmul.u32 %v722, %v723
        %v728 = vmul.u32 %v722, %v724
        %v729 = vshll.u32 %v726, 16
        %v730 = vshrl.u32 %v726, 16
        %v731 = vshll.u32 %v727, 16
        %v732 = vshrl.u32 %v727, 16
        %vm733 = vc.u32 %v725, %v729
        %v734 = vsel %vm733, 1, 0
        %v735 = vadd.s32 %v725, %v729
        %v736 = vadd.s32 %v728, %v734
        %vm737 = vc.u32 %v735, %v731
        %v738 = vsel %vm737, 1, 0
        %v739 = vadd.s32 %v735, %v731
        %v740 = vadd.s32 %v736, %v738
        %v741 = vadd.s32 %v740, %v730
        %v742 = vadd.s32 %v741, %v732
        %v743 = vand.u32 %v720, 65535
        %v744 = vshrl.u32 %v720, 16
        %v745 = vand.u32 %v715, 65535
        %v746 = vshrl.u32 %v715, 16
        %v747 = vmul.u32 %v743, %v745
        %v748 = vmul.u32 %v743, %v746
        %v749 = vmul.u32 %v744, %v745
        %v750 = vmul.u32 %v744, %v746
        %v751 = vshll.u32 %v748, 16
        %v752 = vshrl.u32 %v748, 16
        %v753 = vshll.u32 %v749, 16
        %v754 = vshrl.u32 %v749, 16
        %vm755 = vc.u32 %v747, %v751
        %v756 = vsel %vm755, 1, 0
        %v757 = vadd.s32 %v747, %v751
        %v758 = vadd.s32 %v750, %v756
        %vm759 = vc.u32 %v757, %v753
        %v760 = vsel %vm759, 1, 0
        %v761 = vadd.s32 %v757, %v753
        %v762 = vadd.s32 %v758, %v760
        %v763 = vadd.s32 %v762, %v752
        %v764 = vadd.s32 %v763, %v754
        %v765 = vmul.u32 %v720, %v711
        %v766 = vadd.s32 %v742, %v761
        %vm767 = vc.u32 %v742, %v761
        %v768 = vadd.s32 %v764, 1
        %v769 = vsel %vm767, %v768, %v764
        %v770 = vadd.s32 %v765, %v769
        %v771 = vadd.s32 %v770, 536870912
        %v772 = vshrl.u32 %v771, 30
        %v773 = vshll.u32 %v772, 30
        %v774 = vsub.s32 %v770, %v773
        %vm775 = vcmp.lt.s32.totalorder %v774, 0
        %v776 = vsub.s32 0, %v774
        %v777 = vsel %vm775, %v776, %v774
        %v778 = vclz %v777
        %v779 = vsub.s32 %v778, 2
        %vm780 = vcmp.gt.s32.totalorder 0, %v779
        %v781 = vsel %vm780, 0, %v779
        %v782 = vsub.s32 32, %v781
        %v783 = vshll.u32 %v774, %v781
        %v784 = vshrl.u32 %v766, %v782
        %v785 = vor.u32 %v783, %v784
        %v786 = vsub.s32 4294967266, %v781
        %v787 = vadd.s32 %v786, 127
        %v788 = vshll.u32 %v787, 23
        %v789 = vor.u32 4788187, %v788
        %v790 = vand.u32 2147483647, %v789
        %v792 = vcvt.s32.f32 %v785
        %v793 = vmul.f32 %v792, %v790
        %v794 = vxor.u32 %v793, 2147483648
        %v795 = vsel %vm674, %v794, %v793
        %v796 = vsub.s32 4, %v772
        %v797 = vsel %vm674, %v796, %v772
        %v798 = vsel %vm673, %v208, %v795
        %v799 = vsel %vm673, 0, %v797
        %v800 = vmul.f32 %v798, %v798
        %v801 = vmul.f32 %v800, -0.001358992
        %v802 = vadd.f32 %v801, 0.041655596
        %v803 = vmul.f32 %v800, %v802
        %v804 = vadd.f32 %v803, -0.4999988
        %v805 = vmul.f32 %v800, %v804
        %v806 = vadd.f32 1.0, %v805
        %v807 = vmul.f32 %v798, %v798
        %v808 = vmul.f32 %v807, -0.00019511016
        %v809 = vadd.f32 %v808, 0.008332121
        %v810 = vmul.f32 %v807, %v809
        %v811 = vadd.f32 %v810, -0.16666654
        %v812 = vmul.f32 %v807, %v811
        %v813 = vadd.f32 %v812, 1.0
        %v814 = vmul.f32 %v813, %v798
        %vm815 = vweird.f32 %v208
        %v816 = vadd.s32 %v799, 3
        %v817 = vand.u32 %v816, 3
        %vm818 = vcmp.lt.s32.totalorder %v817, 2
        %vm819 = vcmp.eq.s32.totalorder %v817, 0
        %v820 = vxor.u32 %v814, 2147483648
        %v821 = vsel %vm819, %v806, %v820
        %vm822 = vcmp.eq.s32.totalorder %v817, 2
        %v823 = vxor.u32 %v806, 2147483648
        %v824 = vsel %vm822, %v823, %v814
        %v825 = vsel %vm818, %v821, %v824
        %v826 = vsel %vm815, nan, %v825
        %v827 = vstv %s196
        %v828 = vmul.f32 %v827, %v671
        %v829 = vstv %s195
        %v830 = vadd.f32 %v829, %v828
        %v831 = vstv %s197
        %v832 = vmul.f32 %v831, %v826
        %v833 = vadd.f32 %v830, %v832
        %v834 = vstv %s199
        %v835 = vmul.f32 %v834, %v671
        %v836 = vstv %s198
        %v837 = vadd.f32 %v836, %v835
        %v838 = vstv %s200
        %v839 = vmul.f32 %v838, %v826
        %v840 = vadd.f32 %v837, %v839
        %v841 = vstv %s202
        %v842 = vmul.f32 %v841, %v671
        %v843 = vstv %s201
        %v844 = vadd.f32 %v843, %v842
        %v845 = vstv %s203
        %v846 = vmul.f32 %v845, %v826
        %v847 = vadd.f32 %v844, %v846
        %v848 = vmul.f32 %v362, %v840
        %v849 = vmul.f32 %v517, %v847
        %v850 = vadd.f32 %v848, %v849
        %v851 = vadd.f32 %v833, %v850
        %852 = vst [vmem:[%s194] sm:$0xff] %v851
        %s853 = sand.u32 %s72, 1
        %s854 = scalar_lea.sflag [#allocation4], %s853
        %s855 = sand.u32 %s72, 1
        %s856 = smul.addr %s855, 8
        %s857 = scalar_lea.vmem [#allocation6], %s856
        // Predicated region
        $region71: #{hybrid_xor_forward.1} parent=61 // pred_check
          %p858 = pneg %p82
        $region72: #{hybrid_xor_forward.1} parent=61 // pred_check_branch
          %860 = sbr.rel (%p858) target = $region74
        $region73: #{hybrid_xor_forward.1} parent=61 // pred_region
          %862 = vsyncadd %s854, 0
          %s863 = smul.addr %s17, 8
          %s864 = scalar_lea.hbm %s2, %s863
          %s866 = sshll.u32 %s857, 4
          %s867 = int_to_ptr.vmem [resolvable:$true] %s866
          %s868 = sshll.u32 %s864, 4
          %s869 = int_to_ptr.hbm [resolvable:$true] %s868
          %871 = dma.vmem_to_hbm [thread:$0]  %s867, 128, %s869, %s854
        $region74: #{hybrid_xor_forward.1} parent=61 // pred_fallthru
          _
      $region62: #{hybrid_xor_forward.1} parent=5 // pred_fallthru
        _
      %p872 = scmp.le.s32.totalorder 2, %s12
      // Predicated region
      $region75: #{hybrid_xor_forward.1} parent=5 // pred_check
        %p873 = pneg %p872
      $region76: #{hybrid_xor_forward.1} parent=5 // pred_check_branch
        %875 = sbr.rel (%p873) target = $region78
      $region77: #{hybrid_xor_forward.1} parent=5 // pred_region
        %s876 = ssub.s32 %s12, 2
        // Predicated region
        $region79: #{hybrid_xor_forward.1} parent=77 // pred_check
          %p877 = pneg %p88
        $region80: #{hybrid_xor_forward.1} parent=77 // pred_check_branch
          %879 = sbr.rel (%p877) target = $region82
        $region81: #{hybrid_xor_forward.1} parent=77 // pred_region
          %s880 = sand.u32 %s73, 1
          %s881 = scalar_lea.sflag [#allocation4], %s880
          %s882 = sand.u32 %s73, 1
          %s883 = smul.addr %s882, 8
          %s884 = scalar_lea.vmem [#allocation6], %s883
          %886 = dma.done %s881, 128
        $region82: #{hybrid_xor_forward.1} parent=77 // pred_fallthru
          _
      $region78: #{hybrid_xor_forward.1} parent=5 // pred_fallthru
        _
    $region6: #{hybrid_xor_forward.1} parent=1 // loop_footer
      %s16 = sadd.s32 1, %s12
    $region7: #{hybrid_xor_forward.1} parent=1 // loop_footer_branch
      %11 = sbr.rel target = $region3
    $region8: #{hybrid_xor_forward.1} parent=1 // loop_exit
      _
    %887 = vsyncpa [#allocation4], 1
    %s888 = scalar_lea.sflag [#allocation4], 1
    %889 = vsyncpa %s888, 1
    %890 = vsyncpa [#allocation5], 1
    %s891 = scalar_lea.sflag [#allocation5], 1
    %892 = vsyncpa %s891, 1

</llo_original>
